<compile_context>
chip_gen: v5e
topology: v5e:2x2
jax: 0.10.0
libtpu: 0.0.40
codegen_flags: <defaults>
</compile_context>

<pallas_src>
import math

import jax
import jax.numpy as jnp
from jax.experimental import pallas as pl
from jax.experimental.pallas import tpu as pltpu


_LANE_CANDIDATES = (1024, 512, 256, 128)   # lane-dense last dims (multiples of 128)


def _copy_kernel(x_ref, o_ref):
    # Identity copy of the current (row_tile, lane) tile.
    o_ref[...] = x_ref[...]


def _sublane_multiple(itemsize):
    # Sublane packing: 8 rows for 4-byte, 16 for 2-byte, 32 for 1-byte dtypes.
    return {4: 8, 2: 16, 1: 32}.get(int(itemsize), 8)


def _pick_lane(total):
    for lane in _LANE_CANDIDATES:
        if total % lane == 0:
            return lane
    return None


def _vmem_capacity_bytes():
    try:
        return int(pltpu.get_tpu_info().vmem_capacity_bytes)
    except Exception:
        return 64 << 20  # most conservative (v7x per-TC VMEM)


def _target_tile_bytes(vmem_phys):
    # v7x (64 MiB per-TC VMEM): ~6 MiB tiles; v5e/v6e (128 MiB VMEM): 8 MiB.
    return (8 << 20) if vmem_phys >= (100 << 20) else (6 << 20)


def _pick_row_tile(rows, lane, itemsize, *, target_tile_bytes, min_tiles=1):
    """Rows per tile: ~target_tile_bytes, sublane-aligned, >= min_tiles steps.

    Exact divisors are preferred, but only down to cap//2 — below that a
    ragged (masked) last block is cheaper than thousands of tiny grid steps.
    """
    sub = _sublane_multiple(itemsize)
    cap = max(sub, (target_tile_bytes // (lane * itemsize)) // sub * sub)

    if min_tiles > 1 and rows > sub:
        # Force at least `min_tiles` grid steps (both v7x TCs + DMA overlap).
        per = -(-rows // min_tiles)            # ceil(rows / min_tiles)
        per = max(sub, -(-per // sub) * sub)   # round up to sublane multiple
        cap = min(cap, per)

    if rows <= cap:
        return rows                            # single full-extent block (small inputs)

    floor = max(sub, cap // 2)                 # never accept pathologically small tiles
    t = cap
    while t >= floor:
        if rows % t == 0:
            return t                           # exact divisor: no ragged block
        t -= sub
    return cap                                 # ragged last block (Pallas masks it)


def view_forward(x, target_shape, *, materialize=False):
    """Pallas equivalent of `x.view(-1, *target_shape)`."""
    target_shape = tuple(int(s) for s in target_shape)
    feat = math.prod(target_shape)
    total = math.prod(x.shape)
    if feat == 0 or total % feat != 0:
        raise ValueError(
            f"cannot view array of size {total} into shape (-1, {target_shape})"
        )
    batch = total // feat
    out_shape = (batch,) + target_shape

    if not materialize or total == 0:
        # Optimal path: a contiguous view costs nothing — keep it metadata-only.
        return jnp.reshape(x, out_shape)

    itemsize = jnp.dtype(x.dtype).itemsize
    vmem_phys = _vmem_capacity_bytes()
    target_tile_bytes = _target_tile_bytes(vmem_phys)
    sub = _sublane_multiple(itemsize)

    # Prefer emitting the final (batch, feat) slab directly (no trailing layout
    # copy, output stays lane-dense for the consumer) whenever one sublane
    # group of output rows fits the tile budget.
    if feat % 128 == 0 and feat * itemsize * sub <= target_tile_bytes:
        lane, rows = feat, batch
    else:
        lane = _pick_lane(total)
        if lane is None:
            # TODO(synk): lane-masked copy for element counts not divisible by
            # 128; fall back to the (exact) metadata-only reshape instead.
            return jnp.reshape(x, out_shape)
        rows = total // lane

    total_bytes = total * itemsize
    # Never emit a single-step grid for inputs larger than ~2 MiB: split into
    # >= 4 "parallel" row tiles so both v7x TCs run and read/write DMAs overlap.
    min_tiles = 1 if total_bytes <= (2 << 20) else 4
    row_tile = _pick_row_tile(
        rows, lane, itemsize, target_tile_bytes=target_tile_bytes, min_tiles=min_tiles
    )
    grid = (pl.cdiv(rows, row_tile),)

    # VMEM budget: 4 double-buffered tiles + headroom, capped at ~75% of the
    # chip's physical per-TC VMEM (48 MiB on v7x, 96 MiB on v5e/v6e). The cap
    # never clamps below the kernel's real requirement for our tile targets.
    tile_bytes = row_tile * lane * itemsize
    vmem_cap = (vmem_phys * 3) // 4
    vmem_limit = int(min(vmem_cap, max(4 * tile_bytes + (2 << 20), 8 << 20)))

    # Lane-dense 2-D slab: last dim is a large multiple of 128 → unmasked vst.
    x2d = jnp.reshape(x, (rows, lane))

    out2d = pl.pallas_call(
        _copy_kernel,
        out_shape=jax.ShapeDtypeStruct((rows, lane), x.dtype),
        grid_spec=pltpu.PrefetchScalarGridSpec(
            num_scalar_prefetch=0,
            grid=grid,
            in_specs=[pl.BlockSpec((row_tile, lane), lambda i: (i, 0))],
            out_specs=pl.BlockSpec((row_tile, lane), lambda i: (i, 0)),
        ),
        compiler_params=pltpu.CompilerParams(
            dimension_semantics=("parallel",),   # shards rows across v7x's 2 TCs
            vmem_limit_bytes=vmem_limit,
        ),
        cost_estimate=pl.CostEstimate(
            flops=0, transcendentals=0, bytes_accessed=2 * total * itemsize
        ),
    )(x2d)

    if out2d.shape == out_shape:
        return out2d
    return jnp.reshape(out2d, out_shape)


class ViewPallas:
    """Mirror of the PyTorch `View` module (no parameters)."""

    def __init__(self, shape, materialize=False):
        self.shape = tuple(shape)
        self.materialize = materialize

    def __call__(self, x):
        return view_forward(x, self.shape, materialize=self.materialize)


if __name__ == "__main__":
    key = jax.random.PRNGKey(0)

    # Small NCHW feature map, typical before a Linear layer: (2, 4, 16, 16).
    x = jax.random.normal(key, (2, 4, 16, 16), dtype=jnp.float32)
    ref = jnp.reshape(x, (-1, 4 * 16 * 16))

    # 1) Default path: metadata-only reshape (the recommended fast path).
    view = ViewPallas((4 * 16 * 16,))
    out = jax.block_until_ready(view(x))
    assert out.shape == (2, 1024) and out.dtype == x.dtype
    assert bool(jnp.array_equal(out, ref))

    # 2) Materialized path: lane-dense Pallas copy kernel, direct (batch, feat) out.
    view_mat = ViewPallas((4 * 16 * 16,), materialize=True)
    out_mat = jax.block_until_ready(view_mat(x))
    assert out_mat.shape == (2, 1024) and out_mat.dtype == x.dtype
    assert bool(jnp.array_equal(out_mat, ref))

    # 3) Materialized path, multi-dim target, small buffer (single-tile grid).
    key2 = jax.random.fold_in(key, 1)
    x_big = jax.random.normal(key2, (8, 64, 32, 32), dtype=jnp.float32)
    view_big = ViewPallas((64, 32 * 32), materialize=True)
    out_big = jax.block_until_ready(view_big(x_big))
    ref_big = jnp.reshape(x_big, (-1, 64, 32 * 32))
    assert out_big.shape == (8, 64, 1024) and out_big.dtype == x_big.dtype
    assert bool(jnp.array_equal(out_big, ref_big))

    # 4) Materialized path, >2 MiB buffer → multi-tile "parallel" grid.
    key3 = jax.random.fold_in(key, 2)
    x_med = jax.random.normal(key3, (16, 64, 32, 32), dtype=jnp.float32)
    view_med = ViewPallas((64, 32 * 32), materialize=True)
    out_med = jax.block_until_ready(view_med(x_med))
    ref_med = jnp.reshape(x_med, (-1, 64, 32 * 32))
    assert out_med.shape == (16, 64, 1024) and out_med.dtype == x_med.dtype
    assert bool(jnp.array_equal(out_med, ref_med))

    print("KERNEL_OK")
</pallas_src>

<mosaic_0001>
module attributes {stable_mosaic.version = 11 : i64} {
  func.func @_copy_kernel(%arg0: i32, %arg1: memref<2x1024xf32, #tpu.memory_space<vmem>>, %arg2: memref<2x1024xf32, #tpu.memory_space<vmem>>) attributes {dimension_semantics = [#tpu.dimension_semantics<parallel>], iteration_bounds = array<i64: 1>, scalar_prefetch = 0 : i64, scratch_operands = 0 : i64, tpu.core_type = #tpu.core_type<tc>, window_params = [{transform_indices = @transform_0, window_bounds = array<i64: 2, 1024>}, {transform_indices = @transform_1, window_bounds = array<i64: 2, 1024>}]} {
    %c0 = arith.constant 0 : index
    %c0_0 = arith.constant 0 : index
    %0 = vector.load %arg1[%c0, %c0_0] : memref<2x1024xf32, #tpu.memory_space<vmem>>, vector<2x1024xf32>
    %c0_1 = arith.constant 0 : index
    %c0_2 = arith.constant 0 : index
    %1 = vector.load %arg2[%c0_1, %c0_2] : memref<2x1024xf32, #tpu.memory_space<vmem>>, vector<2x1024xf32>
    tpu.vector_store %arg2[%c0_1, %c0_2], %0 {strides = array<i32>} : memref<2x1024xf32, #tpu.memory_space<vmem>>, vector<2x1024xf32>,
    return
  }
  func.func @transform_0(%arg0: i32) -> (i32, i32) {
    %c0_i32 = arith.constant 0 : i32
    %c0_i32_0 = arith.constant 0 : i32
    return %arg0, %c0_i32 : i32, i32
  }
  func.func @transform_1(%arg0: i32) -> (i32, i32) {
    %c0_i32 = arith.constant 0 : i32
    %c0_i32_0 = arith.constant 0 : i32
    return %arg0, %c0_i32 : i32, i32
  }
}

</mosaic_0001>

<llo_original>
// kernel: tpu_custom_call.1
$region0: #{tpu_custom_call.1}
  #allocation0 [shape = 'u32[]', space=smem, size = 0x4, offset = 0x4, fixed_abs, tag = 'smem constant byte address 0x4 - core index']
  #allocation1 [shape = 'u32[72,128]{1,0:T(1,128)}', space=vmem, size = 0x9000, scoped, tag = 'internal scratch']
  %s0 = inlined_call_operand.hbm [shape: f32[2,1024], index: 0, kind: input, shape index: {}]
  %s1 = inlined_call_operand.hbm [shape: f32[2,1024], index: 1, kind: output, shape index: {}]
  %s2 = sld [smem:[#allocation0]]
  $region18: #{tpu_custom_call.1} parent=0
    _
  %s4 = ssub.s32 1, %s2
  %s5 = scalar_select 0, %s4, %s2
  $region1: #{tpu_custom_call.1} parent=0
    #allocation2 [shape = 'u8[8192]{0}', space=vmem, size = 0x2000, scoped, tag = 'input window, operand 0, single buffered']
    #allocation3 [shape = 's32[1]{0}', space=sflag, size = 0x4, scoped, tag = 'scoped memory for tpu_custom_call.1']
    #allocation4 [shape = 's32[1]{0}', space=sflag, size = 0x4, scoped, tag = 'scoped memory for tpu_custom_call.1']
    #allocation5 [shape = 'u8[8192]{0}', space=vmem, size = 0x2000, scoped, tag = 'output window, operand 0, single buffered']
    %6 = vsyncpa [#allocation3], 0
    %7 = vsyncpa [#allocation4], 0
    // Predicated region
    $region2: #{tpu_custom_call.1} parent=1 // pred_check
      _
    $region3: #{tpu_custom_call.1} parent=1 // pred_check_branch
      %9 = sbr.rel (0) target = $region5
    $region4: #{tpu_custom_call.1} parent=1 // pred_region
      %11 = vsyncadd [#allocation3], 0
      %s13 = sshll.u32 %s0, 4
      %s14 = int_to_ptr.hbm [resolvable:$true] %s13
      %s15 = sshll.u32 [#allocation2], 4
      %s16 = int_to_ptr.vmem [resolvable:$true] %s15
      %18 = dma.hbm_to_vmem [thread:$0]  %s14, 256, %s16, [#allocation3]
    $region5: #{tpu_custom_call.1} parent=1 // pred_fallthru
      _
    // Predicated region
    $region6: #{tpu_custom_call.1} parent=1 // pred_check
      _
    $region7: #{tpu_custom_call.1} parent=1 // pred_check_branch
      %20 = sbr.rel (0) target = $region9
    $region8: #{tpu_custom_call.1} parent=1 // pred_region
      %22 = dma.done [#allocation3], 256
    $region9: #{tpu_custom_call.1} parent=1 // pred_fallthru
      _
    %v23 = vld [vmem:[#allocation2] sm:$0xff]
    %v24 = vld [vmem:[#allocation2 + $0x8] sm:$0xff]
    %25 = vst [vmem:[#allocation5] sm:$0xff] %v23
    %26 = vst [vmem:[#allocation5 + $0x8] sm:$0xff] %v24
    // Predicated region
    $region10: #{tpu_custom_call.1} parent=1 // pred_check
      _
    $region11: #{tpu_custom_call.1} parent=1 // pred_check_branch
      %28 = sbr.rel (0) target = $region13
    $region12: #{tpu_custom_call.1} parent=1 // pred_region
      %30 = vsyncadd [#allocation4], 0
      %s32 = sshll.u32 [#allocation5], 4
      %s33 = int_to_ptr.vmem [resolvable:$true] %s32
      %s34 = sshll.u32 %s1, 4
      %s35 = int_to_ptr.hbm [resolvable:$true] %s34
      %37 = dma.vmem_to_hbm [thread:$0]  %s33, 256, %s35, [#allocation4]
    $region13: #{tpu_custom_call.1} parent=1 // pred_fallthru
      _
    // Predicated region
    $region14: #{tpu_custom_call.1} parent=1 // pred_check
      _
    $region15: #{tpu_custom_call.1} parent=1 // pred_check_branch
      %39 = sbr.rel (0) target = $region17
    $region16: #{tpu_custom_call.1} parent=1 // pred_region
      %41 = dma.done [#allocation4], 256
    $region17: #{tpu_custom_call.1} parent=1 // pred_fallthru
      _
    %42 = vsyncpa [#allocation3], 1
    %43 = vsyncpa [#allocation4], 1

</llo_original>
